<compile_context>
chip_gen: v6e
topology: v6e:2x2x1
jax: 0.10.0
libtpu: 0.0.40
codegen_flags: <defaults>
</compile_context>

<pallas_src>
import functools

import jax
import jax.numpy as jnp
from jax.experimental import pallas as pl
from jax.experimental.pallas import tpu as pltpu

# TrajParamIndex layout (contiguous fields, as implied by the module's slicing).
X, Y, Z = 0, 1, 2
LENGTH, WIDTH, HEIGHT = 3, 4, 5
VX, VY = 6, 7
COS_YAW, SIN_YAW = 8, 9
END_OF_INDEX = 10

LN_EPS = 1e-5  # PyTorch nn.LayerNorm default eps


# ---------------------------------------------------------------------------
# Pallas kernel (rows on lanes: activations are (features, rows))
# ---------------------------------------------------------------------------
def anchor_encoder_kernel(x_ref, w1_ref, wsq_ref, v_ref, out_ref, *,
                          seg_dims, matmul_dtype):
    """One row-tile of the AnchorEncoder forward pass.

    x_ref  : (END_OF_INDEX, TM) f32   trajectory params, rows on lanes
    w1_ref : (E, END_OF_INDEX)  f32   fused first-layer weight (zero-padded)
    wsq_ref: (3E, E)            f32   [W2 block-diag; W3 fusion; W4 fusion]
    v_ref  : (E, 12)            f32   packed bias/gamma/beta columns
    out_ref: (E, TM)            f32
    """
    E = sum(seg_dims)

    x = x_ref[...]
    w1 = w1_ref[...]
    wsq = wsq_ref[...]
    v = v_ref[...]

    def col(k):                       # (E, 1) column, broadcasts over lanes
        return v[:, k:k + 1]

    def mm(w, h):
        # Optionally feed the MXU bf16 operands (v6e/v7x); accumulate in f32.
        return jnp.dot(w.astype(matmul_dtype), h.astype(matmul_dtype),
                       preferred_element_type=jnp.float32)

    def layernorm(h, gamma, beta, bounds):
        # Per-segment LayerNorm over the feature (sublane) axis; f32 VPU/XLU.
        pieces = []
        for r0, r1 in bounds:                         # static python loop
            hs = h[r0:r1, :]
            mean = jnp.mean(hs, axis=0, keepdims=True)
            c = hs - mean
            var = jnp.mean(c * c, axis=0, keepdims=True)
            pieces.append(c * jax.lax.rsqrt(var + LN_EPS))
        hn = pieces[0] if len(pieces) == 1 else jnp.concatenate(pieces, axis=0)
        return hn * gamma + beta

    seg_bounds = []
    r = 0
    for d in seg_dims:
        seg_bounds.append((r, r + d))
        r += d
    full_bounds = [(0, E)]

    # --- four sub-embedding MLPs, fused ------------------------------------
    h = jnp.maximum(mm(w1, x) + col(0), 0.0)                # Linear1 + ReLU
    h = layernorm(h, col(1), col(2), seg_bounds)            # LayerNorm1
    h = jnp.maximum(mm(wsq[0:E, :], h) + col(3), 0.0)       # Linear2 + ReLU
    h = layernorm(h, col(4), col(5), seg_bounds)            # LayerNorm2
    # --- fusion MLP ---------------------------------------------------------
    h = jnp.maximum(mm(wsq[E:2 * E, :], h) + col(6), 0.0)
    h = layernorm(h, col(7), col(8), full_bounds)
    h = jnp.maximum(mm(wsq[2 * E:3 * E, :], h) + col(9), 0.0)
    out_ref[...] = layernorm(h, col(10), col(11), full_bounds)


# ---------------------------------------------------------------------------
# Wrapper
# ---------------------------------------------------------------------------
def _choose_tile_m(M, tile_m):
    """Row (lane) tile must be a multiple of 128.  Shrink for tiny inputs so we
    don't over-pad; otherwise keep it large (per-grid-step overhead ~0.35us).
    Where possible keep >= 2 grid steps so both v7x TensorCores get work."""
    tile_m = max(128, (tile_m // 128) * 128)
    while tile_m > 128 and pl.cdiv(M, tile_m) < 2:
        tile_m = max(128, (tile_m // 2 // 128) * 128)
    return tile_m


def anchor_encoder_forward(trajs, packed, seg_dims, *, tile_m=1024,
                           matmul_dtype=jnp.float32):
    w1, wsq, v = packed
    E = w1.shape[0]
    B, N, P = trajs.shape
    assert P == END_OF_INDEX, (P, END_OF_INDEX)
    M = B * N

    # Rows-on-lanes layout: (P, M).
    xt = trajs.reshape(M, P).astype(jnp.float32).T

    tile_m = _choose_tile_m(M, tile_m)
    grid_m = pl.cdiv(M, tile_m)
    M_pad = grid_m * tile_m
    if M_pad != M:                       # masked/padded final tile
        xt = jnp.pad(xt, ((0, 0), (0, M_pad - M)))

    kernel = functools.partial(anchor_encoder_kernel,
                               seg_dims=tuple(int(d) for d in seg_dims),
                               matmul_dtype=matmul_dtype)

    out_t = pl.pallas_call(
        kernel,
        out_shape=jax.ShapeDtypeStruct((E, M_pad), jnp.float32),
        grid_spec=pltpu.PrefetchScalarGridSpec(
            num_scalar_prefetch=0,
            grid=(grid_m,),
            in_specs=[
                pl.BlockSpec((P, tile_m), lambda i: (0, i)),   # trajs tile
                pl.BlockSpec(w1.shape, lambda i: (0, 0)),      # whole params
                pl.BlockSpec(wsq.shape, lambda i: (0, 0)),
                pl.BlockSpec(v.shape, lambda i: (0, 0)),
            ],
            out_specs=pl.BlockSpec((E, tile_m), lambda i: (0, i)),
        ),
        compiler_params=pltpu.CompilerParams(
            dimension_semantics=("parallel",),
        ),
    )(xt, w1, wsq, v)

    return out_t[:, :M].T.reshape(B, N, E)


# ---------------------------------------------------------------------------
# Parameter init (PyTorch layer shapes), packing, and plain-JAX reference
# ---------------------------------------------------------------------------
def init_block_params(key, in_dim, out_dim):
    """Deterministic synthetic init matching the PyTorch layer shapes."""
    k = jax.random.split(key, 8)

    def xavier(kk, fan_in, fan_out):
        std = (2.0 / (fan_in + fan_out)) ** 0.5
        return std * jax.random.normal(kk, (fan_in, fan_out), jnp.float32)

    w1 = xavier(k[0], in_dim, out_dim)
    b1 = 0.1 * jax.random.normal(k[1], (1, out_dim), jnp.float32)
    g1 = 1.0 + 0.1 * jax.random.normal(k[2], (1, out_dim), jnp.float32)
    be1 = 0.1 * jax.random.normal(k[3], (1, out_dim), jnp.float32)
    w2 = xavier(k[4], out_dim, out_dim)
    b2 = 0.1 * jax.random.normal(k[5], (1, out_dim), jnp.float32)
    g2 = 1.0 + 0.1 * jax.random.normal(k[6], (1, out_dim), jnp.float32)
    be2 = 0.1 * jax.random.normal(k[7], (1, out_dim), jnp.float32)
    return [w1, b1, g1, be1, w2, b2, g2, be2]


def init_anchor_encoder_params(key, pos_d, dim_d, ori_d, vel_d):
    embed_dim = pos_d + dim_d + ori_d + vel_d
    keys = jax.random.split(key, 5)
    params = []
    params += init_block_params(keys[0], 3, pos_d)        # position_embed_layer
    params += init_block_params(keys[1], 3, dim_d)        # dimension_embed_layer
    params += init_block_params(keys[2], 2, ori_d)        # orientation_embed_layer
    params += init_block_params(keys[3], 2, vel_d)        # velocity_embed_layer
    params += init_block_params(keys[4], embed_dim, embed_dim)  # fusion_layer
    return params, embed_dim


def pack_params(params, seg_dims):
    """Pack the 40 per-layer params into 3 kernel arrays (transposed layout)."""
    pos_d, dim_d, ori_d, vel_d = seg_dims
    E = sum(seg_dims)
    blocks = [params[8 * i:8 * (i + 1)] for i in range(5)]
    sub, fus = blocks[:4], blocks[4]

    row_off = [0, pos_d, pos_d + dim_d, pos_d + dim_d + ori_d, E]
    col_rng = [(X, Z + 1), (LENGTH, HEIGHT + 1),
               (COS_YAW, SIN_YAW + 1), (VX, VY + 1)]

    w1 = jnp.zeros((E, END_OF_INDEX), jnp.float32)   # fused first layer
    w2 = jnp.zeros((E, E), jnp.float32)              # block-diag second layer
    for k in range(4):
        r0, r1 = row_off[k], row_off[k + 1]
        c0, c1 = col_rng[k]
        w1 = w1.at[r0:r1, c0:c1].set(sub[k][0].T)
        w2 = w2.at[r0:r1, r0:r1].set(sub[k][4].T)

    wsq = jnp.concatenate([w2, fus[0].T, fus[4].T], axis=0)   # (3E, E)

    def cat_sub(idx):   # four (1, d_k) rows -> one (E, 1) column
        return jnp.concatenate([sub[k][idx] for k in range(4)], axis=1).T

    cols = [cat_sub(1), cat_sub(2), cat_sub(3),      # b1, g1, be1
            cat_sub(5), cat_sub(6), cat_sub(7),      # b2, g2, be2
            fus[1].T, fus[2].T, fus[3].T,            # fusion b1, g1, be1
            fus[5].T, fus[6].T, fus[7].T]            # fusion b2, g2, be2
    v = jnp.concatenate(cols, axis=1)                # (E, 12)
    return w1, wsq, v


def _layernorm_ref(x, gamma, beta):
    mean = jnp.mean(x, axis=-1, keepdims=True)
    var = jnp.mean((x - mean) ** 2, axis=-1, keepdims=True)
    return (x - mean) * jax.lax.rsqrt(var + LN_EPS) * gamma + beta


def _mlp_block_ref(x, w1, b1, g1, be1, w2, b2, g2, be2):
    h = jnp.maximum(jnp.dot(x, w1, preferred_element_type=jnp.float32) + b1, 0.0)
    h = _layernorm_ref(h, g1, be1)
    h = jnp.maximum(jnp.dot(h, w2, preferred_element_type=jnp.float32) + b2, 0.0)
    return _layernorm_ref(h, g2, be2)


def anchor_encoder_reference(trajs, params):
    """Plain-JAX reference (mirrors the PyTorch forward) for correctness."""
    t = trajs.astype(jnp.float32)
    pos_e = _mlp_block_ref(t[:, :, X:Z + 1], *params[0:8])
    dim_e = _mlp_block_ref(t[:, :, LENGTH:HEIGHT + 1], *params[8:16])
    ori_e = _mlp_block_ref(t[:, :, COS_YAW:SIN_YAW + 1], *params[16:24])
    vel_e = _mlp_block_ref(t[:, :, VX:VY + 1], *params[24:32])
    cat = jnp.concatenate([pos_e, dim_e, ori_e, vel_e], axis=-1)
    return _mlp_block_ref(cat, *params[32:40])


if __name__ == "__main__":
    key = jax.random.PRNGKey(0)
    k_param, k_traj = jax.random.split(key)

    # Small, forward-consistent shapes.
    B, N = 2, 64                         # batch, number of anchor queries
    pos_d = dim_d = ori_d = vel_d = 8    # sub-embedding dims -> embed_dim = 32
    seg_dims = (pos_d, dim_d, ori_d, vel_d)

    params, embed_dim = init_anchor_encoder_params(k_param, *seg_dims)
    packed = pack_params(params, seg_dims)

    # Synthetic trajs [B, N, END_OF_INDEX] (stand-in for anchor init_trajs).
    trajs = jax.random.normal(k_traj, (B, N, END_OF_INDEX), jnp.float32)

    # f32 path (default): strict correctness check vs. plain-JAX reference.
    out = jax.block_until_ready(anchor_encoder_forward(trajs, packed, seg_dims))
    ref = anchor_encoder_reference(trajs, params)
    assert out.shape == (B, N, embed_dim), out.shape
    err = float(jnp.max(jnp.abs(out - ref)))
    assert err < 2e-4, err

    # Opt-in bf16 MXU operands (v6e/v7x fast path); elementwise math stays f32.
    out_bf16 = jax.block_until_ready(
        anchor_encoder_forward(trajs, packed, seg_dims,
                               matmul_dtype=jnp.bfloat16))
    assert bool(jnp.isfinite(out_bf16).all())
    assert float(jnp.mean(jnp.abs(out_bf16 - ref))) < 2e-2

    print("KERNEL_OK")
</pallas_src>

<mosaic_0001>
module attributes {stable_mosaic.version = 11 : i64} {
  func.func @anchor_encoder_kernel(%arg0: i32, %arg1: memref<10x128xf32, #tpu.memory_space<vmem>>, %arg2: memref<32x10xf32, #tpu.memory_space<vmem>>, %arg3: memref<96x32xf32, #tpu.memory_space<vmem>>, %arg4: memref<32x12xf32, #tpu.memory_space<vmem>>, %arg5: memref<32x128xf32, #tpu.memory_space<vmem>>) attributes {dimension_semantics = [#tpu.dimension_semantics<parallel>], iteration_bounds = array<i64: 1>, scalar_prefetch = 0 : i64, scratch_operands = 0 : i64, tpu.core_type = #tpu.core_type<tc>, window_params = [{transform_indices = @transform_0, window_bounds = array<i64: 10, 128>}, {pipeline_mode = #tpu.pipeline_mode<synchronous>, transform_indices = @transform_1, window_bounds = array<i64: 32, 10>}, {pipeline_mode = #tpu.pipeline_mode<synchronous>, transform_indices = @transform_2, window_bounds = array<i64: 96, 32>}, {pipeline_mode = #tpu.pipeline_mode<synchronous>, transform_indices = @transform_3, window_bounds = array<i64: 32, 12>}, {transform_indices = @transform_4, window_bounds = array<i64: 32, 128>}]} {
    %c0 = arith.constant 0 : index
    %c0_0 = arith.constant 0 : index
    %0 = vector.load %arg1[%c0, %c0_0] : memref<10x128xf32, #tpu.memory_space<vmem>>, vector<10x128xf32>
    %c0_1 = arith.constant 0 : index
    %c0_2 = arith.constant 0 : index
    %1 = vector.load %arg2[%c0_1, %c0_2] : memref<32x10xf32, #tpu.memory_space<vmem>>, vector<32x10xf32>
    %c0_3 = arith.constant 0 : index
    %c0_4 = arith.constant 0 : index
    %2 = vector.load %arg3[%c0_3, %c0_4] : memref<96x32xf32, #tpu.memory_space<vmem>>, vector<96x32xf32>
    %c0_5 = arith.constant 0 : index
    %c0_6 = arith.constant 0 : index
    %3 = vector.load %arg4[%c0_5, %c0_6] : memref<32x12xf32, #tpu.memory_space<vmem>>, vector<32x12xf32>
    %cst = arith.constant dense<0.000000e+00> : vector<32x128xf32>
    %4 = tpu.matmul %1, %0, %cst {dimension_numbers = #tpu.dot_dimension_numbers<[1], [0], [0], [1], [0, 0, 1, 1], [], []>} : vector<32x10xf32>, vector<10x128xf32>, vector<32x128xf32> -> vector<32x128xf32>
    %5 = vector.extract_strided_slice %3 {offsets = [0, 0], sizes = [32, 1], strides = [1, 1]} : vector<32x12xf32> to vector<32x1xf32>
    %6 = vector.broadcast %5 : vector<32x1xf32> to vector<32x128xf32>
    %7 = arith.addf %4, %6 : vector<32x128xf32>
    %cst_7 = arith.constant 0.000000e+00 : f32
    %8 = vector.broadcast %cst_7 : f32 to vector<32x128xf32>
    %9 = arith.maximumf %7, %8 : vector<32x128xf32>
    %10 = vector.extract_strided_slice %3 {offsets = [0, 1], sizes = [32, 1], strides = [1, 1]} : vector<32x12xf32> to vector<32x1xf32>
    %11 = vector.extract_strided_slice %3 {offsets = [0, 2], sizes = [32, 1], strides = [1, 1]} : vector<32x12xf32> to vector<32x1xf32>
    %12 = vector.extract_strided_slice %9 {offsets = [0, 0], sizes = [8, 128], strides = [1, 1]} : vector<32x128xf32> to vector<8x128xf32>
    %cst_8 = arith.constant dense<0.000000e+00> : vector<128xf32>
    %13 = vector.multi_reduction <add>, %12, %cst_8 [0] : vector<8x128xf32> to vector<128xf32>
    %14 = vector.shape_cast %13 : vector<128xf32> to vector<1x128xf32>
    %cst_9 = arith.constant 8.000000e+00 : f32
    %15 = vector.broadcast %cst_9 : f32 to vector<1x128xf32>
    %16 = arith.divf %14, %15 : vector<1x128xf32>
    %17 = vector.broadcast %16 : vector<1x128xf32> to vector<8x128xf32>
    %18 = arith.subf %12, %17 : vector<8x128xf32>
    %19 = arith.mulf %18, %18 : vector<8x128xf32>
    %cst_10 = arith.constant dense<0.000000e+00> : vector<128xf32>
    %20 = vector.multi_reduction <add>, %19, %cst_10 [0] : vector<8x128xf32> to vector<128xf32>
    %21 = vector.shape_cast %20 : vector<128xf32> to vector<1x128xf32>
    %cst_11 = arith.constant 8.000000e+00 : f32
    %22 = vector.broadcast %cst_11 : f32 to vector<1x128xf32>
    %23 = arith.divf %21, %22 : vector<1x128xf32>
    %cst_12 = arith.constant 9.99999974E-6 : f32
    %24 = vector.broadcast %cst_12 : f32 to vector<1x128xf32>
    %25 = arith.addf %23, %24 : vector<1x128xf32>
    %26 = math.rsqrt %25 : vector<1x128xf32>
    %27 = vector.broadcast %26 : vector<1x128xf32> to vector<8x128xf32>
    %28 = arith.mulf %18, %27 : vector<8x128xf32>
    %29 = vector.extract_strided_slice %9 {offsets = [8, 0], sizes = [8, 128], strides = [1, 1]} : vector<32x128xf32> to vector<8x128xf32>
    %cst_13 = arith.constant dense<0.000000e+00> : vector<128xf32>
    %30 = vector.multi_reduction <add>, %29, %cst_13 [0] : vector<8x128xf32> to vector<128xf32>
    %31 = vector.shape_cast %30 : vector<128xf32> to vector<1x128xf32>
    %cst_14 = arith.constant 8.000000e+00 : f32
    %32 = vector.broadcast %cst_14 : f32 to vector<1x128xf32>
    %33 = arith.divf %31, %32 : vector<1x128xf32>
    %34 = vector.broadcast %33 : vector<1x128xf32> to vector<8x128xf32>
    %35 = arith.subf %29, %34 : vector<8x128xf32>
    %36 = arith.mulf %35, %35 : vector<8x128xf32>
    %cst_15 = arith.constant dense<0.000000e+00> : vector<128xf32>
    %37 = vector.multi_reduction <add>, %36, %cst_15 [0] : vector<8x128xf32> to vector<128xf32>
    %38 = vector.shape_cast %37 : vector<128xf32> to vector<1x128xf32>
    %cst_16 = arith.constant 8.000000e+00 : f32
    %39 = vector.broadcast %cst_16 : f32 to vector<1x128xf32>
    %40 = arith.divf %38, %39 : vector<1x128xf32>
    %cst_17 = arith.constant 9.99999974E-6 : f32
    %41 = vector.broadcast %cst_17 : f32 to vector<1x128xf32>
    %42 = arith.addf %40, %41 : vector<1x128xf32>
    %43 = math.rsqrt %42 : vector<1x128xf32>
    %44 = vector.broadcast %43 : vector<1x128xf32> to vector<8x128xf32>
    %45 = arith.mulf %35, %44 : vector<8x128xf32>
    %46 = vector.extract_strided_slice %9 {offsets = [16, 0], sizes = [8, 128], strides = [1, 1]} : vector<32x128xf32> to vector<8x128xf32>
    %cst_18 = arith.constant dense<0.000000e+00> : vector<128xf32>
    %47 = vector.multi_reduction <add>, %46, %cst_18 [0] : vector<8x128xf32> to vector<128xf32>
    %48 = vector.shape_cast %47 : vector<128xf32> to vector<1x128xf32>
    %cst_19 = arith.constant 8.000000e+00 : f32
    %49 = vector.broadcast %cst_19 : f32 to vector<1x128xf32>
    %50 = arith.divf %48, %49 : vector<1x128xf32>
    %51 = vector.broadcast %50 : vector<1x128xf32> to vector<8x128xf32>
    %52 = arith.subf %46, %51 : vector<8x128xf32>
    %53 = arith.mulf %52, %52 : vector<8x128xf32>
    %cst_20 = arith.constant dense<0.000000e+00> : vector<128xf32>
    %54 = vector.multi_reduction <add>, %53, %cst_20 [0] : vector<8x128xf32> to vector<128xf32>
    %55 = vector.shape_cast %54 : vector<128xf32> to vector<1x128xf32>
    %cst_21 = arith.constant 8.000000e+00 : f32
    %56 = vector.broadcast %cst_21 : f32 to vector<1x128xf32>
    %57 = arith.divf %55, %56 : vector<1x128xf32>
    %cst_22 = arith.constant 9.99999974E-6 : f32
    %58 = vector.broadcast %cst_22 : f32 to vector<1x128xf32>
    %59 = arith.addf %57, %58 : vector<1x128xf32>
    %60 = math.rsqrt %59 : vector<1x128xf32>
    %61 = vector.broadcast %60 : vector<1x128xf32> to vector<8x128xf32>
    %62 = arith.mulf %52, %61 : vector<8x128xf32>
    %63 = vector.extract_strided_slice %9 {offsets = [24, 0], sizes = [8, 128], strides = [1, 1]} : vector<32x128xf32> to vector<8x128xf32>
    %cst_23 = arith.constant dense<0.000000e+00> : vector<128xf32>
    %64 = vector.multi_reduction <add>, %63, %cst_23 [0] : vector<8x128xf32> to vector<128xf32>
    %65 = vector.shape_cast %64 : vector<128xf32> to vector<1x128xf32>
    %cst_24 = arith.constant 8.000000e+00 : f32
    %66 = vector.broadcast %cst_24 : f32 to vector<1x128xf32>
    %67 = arith.divf %65, %66 : vector<1x128xf32>
    %68 = vector.broadcast %67 : vector<1x128xf32> to vector<8x128xf32>
    %69 = arith.subf %63, %68 : vector<8x128xf32>
    %70 = arith.mulf %69, %69 : vector<8x128xf32>
    %cst_25 = arith.constant dense<0.000000e+00> : vector<128xf32>
    %71 = vector.multi_reduction <add>, %70, %cst_25 [0] : vector<8x128xf32> to vector<128xf32>
    %72 = vector.shape_cast %71 : vector<128xf32> to vector<1x128xf32>
    %cst_26 = arith.constant 8.000000e+00 : f32
    %73 = vector.broadcast %cst_26 : f32 to vector<1x128xf32>
    %74 = arith.divf %72, %73 : vector<1x128xf32>
    %cst_27 = arith.constant 9.99999974E-6 : f32
    %75 = vector.broadcast %cst_27 : f32 to vector<1x128xf32>
    %76 = arith.addf %74, %75 : vector<1x128xf32>
    %77 = math.rsqrt %76 : vector<1x128xf32>
    %78 = vector.broadcast %77 : vector<1x128xf32> to vector<8x128xf32>
    %79 = arith.mulf %69, %78 : vector<8x128xf32>
    %80 = tpu.concatenate %28, %45, %62, %79 in 0 : vector<8x128xf32>, vector<8x128xf32>, vector<8x128xf32>, vector<8x128xf32> -> vector<32x128xf32>
    %81 = vector.broadcast %10 : vector<32x1xf32> to vector<32x128xf32>
    %82 = arith.mulf %80, %81 : vector<32x128xf32>
    %83 = vector.broadcast %11 : vector<32x1xf32> to vector<32x128xf32>
    %84 = arith.addf %82, %83 : vector<32x128xf32>
    %85 = vector.extract_strided_slice %2 {offsets = [0, 0], sizes = [32, 32], strides = [1, 1]} : vector<96x32xf32> to vector<32x32xf32>
    %cst_28 = arith.constant dense<0.000000e+00> : vector<32x128xf32>
    %86 = tpu.matmul %85, %84, %cst_28 {dimension_numbers = #tpu.dot_dimension_numbers<[1], [0], [0], [1], [0, 0, 1, 1], [], []>} : vector<32x32xf32>, vector<32x128xf32>, vector<32x128xf32> -> vector<32x128xf32>
    %87 = vector.extract_strided_slice %3 {offsets = [0, 3], sizes = [32, 1], strides = [1, 1]} : vector<32x12xf32> to vector<32x1xf32>
    %88 = vector.broadcast %87 : vector<32x1xf32> to vector<32x128xf32>
    %89 = arith.addf %86, %88 : vector<32x128xf32>
    %cst_29 = arith.constant 0.000000e+00 : f32
    %90 = vector.broadcast %cst_29 : f32 to vector<32x128xf32>
    %91 = arith.maximumf %89, %90 : vector<32x128xf32>
    %92 = vector.extract_strided_slice %3 {offsets = [0, 4], sizes = [32, 1], strides = [1, 1]} : vector<32x12xf32> to vector<32x1xf32>
    %93 = vector.extract_strided_slice %3 {offsets = [0, 5], sizes = [32, 1], strides = [1, 1]} : vector<32x12xf32> to vector<32x1xf32>
    %94 = vector.extract_strided_slice %91 {offsets = [0, 0], sizes = [8, 128], strides = [1, 1]} : vector<32x128xf32> to vector<8x128xf32>
    %cst_30 = arith.constant dense<0.000000e+00> : vector<128xf32>
    %95 = vector.multi_reduction <add>, %94, %cst_30 [0] : vector<8x128xf32> to vector<128xf32>
    %96 = vector.shape_cast %95 : vector<128xf32> to vector<1x128xf32>
    %cst_31 = arith.constant 8.000000e+00 : f32
    %97 = vector.broadcast %cst_31 : f32 to vector<1x128xf32>
    %98 = arith.divf %96, %97 : vector<1x128xf32>
    %99 = vector.broadcast %98 : vector<1x128xf32> to vector<8x128xf32>
    %100 = arith.subf %94, %99 : vector<8x128xf32>
    %101 = arith.mulf %100, %100 : vector<8x128xf32>
    %cst_32 = arith.constant dense<0.000000e+00> : vector<128xf32>
    %102 = vector.multi_reduction <add>, %101, %cst_32 [0] : vector<8x128xf32> to vector<128xf32>
    %103 = vector.shape_cast %102 : vector<128xf32> to vector<1x128xf32>
    %cst_33 = arith.constant 8.000000e+00 : f32
    %104 = vector.broadcast %cst_33 : f32 to vector<1x128xf32>
    %105 = arith.divf %103, %104 : vector<1x128xf32>
    %cst_34 = arith.constant 9.99999974E-6 : f32
    %106 = vector.broadcast %cst_34 : f32 to vector<1x128xf32>
    %107 = arith.addf %105, %106 : vector<1x128xf32>
    %108 = math.rsqrt %107 : vector<1x128xf32>
    %109 = vector.broadcast %108 : vector<1x128xf32> to vector<8x128xf32>
    %110 = arith.mulf %100, %109 : vector<8x128xf32>
    %111 = vector.extract_strided_slice %91 {offsets = [8, 0], sizes = [8, 128], strides = [1, 1]} : vector<32x128xf32> to vector<8x128xf32>
    %cst_35 = arith.constant dense<0.000000e+00> : vector<128xf32>
    %112 = vector.multi_reduction <add>, %111, %cst_35 [0] : vector<8x128xf32> to vector<128xf32>
    %113 = vector.shape_cast %112 : vector<128xf32> to vector<1x128xf32>
    %cst_36 = arith.constant 8.000000e+00 : f32
    %114 = vector.broadcast %cst_36 : f32 to vector<1x128xf32>
    %115 = arith.divf %113, %114 : vector<1x128xf32>
    %116 = vector.broadcast %115 : vector<1x128xf32> to vector<8x128xf32>
    %117 = arith.subf %111, %116 : vector<8x128xf32>
    %118 = arith.mulf %117, %117 : vector<8x128xf32>
    %cst_37 = arith.constant dense<0.000000e+00> : vector<128xf32>
    %119 = vector.multi_reduction <add>, %118, %cst_37 [0] : vector<8x128xf32> to vector<128xf32>
    %120 = vector.shape_cast %119 : vector<128xf32> to vector<1x128xf32>
    %cst_38 = arith.constant 8.000000e+00 : f32
    %121 = vector.broadcast %cst_38 : f32 to vector<1x128xf32>
    %122 = arith.divf %120, %121 : vector<1x128xf32>
    %cst_39 = arith.constant 9.99999974E-6 : f32
    %123 = vector.broadcast %cst_39 : f32 to vector<1x128xf32>
    %124 = arith.addf %122, %123 : vector<1x128xf32>
    %125 = math.rsqrt %124 : vector<1x128xf32>
    %126 = vector.broadcast %125 : vector<1x128xf32> to vector<8x128xf32>
    %127 = arith.mulf %117, %126 : vector<8x128xf32>
    %128 = vector.extract_strided_slice %91 {offsets = [16, 0], sizes = [8, 128], strides = [1, 1]} : vector<32x128xf32> to vector<8x128xf32>
    %cst_40 = arith.constant dense<0.000000e+00> : vector<128xf32>
    %129 = vector.multi_reduction <add>, %128, %cst_40 [0] : vector<8x128xf32> to vector<128xf32>
    %130 = vector.shape_cast %129 : vector<128xf32> to vector<1x128xf32>
    %cst_41 = arith.constant 8.000000e+00 : f32
    %131 = vector.broadcast %cst_41 : f32 to vector<1x128xf32>
    %132 = arith.divf %130, %131 : vector<1x128xf32>
    %133 = vector.broadcast %132 : vector<1x128xf32> to vector<8x128xf32>
    %134 = arith.subf %128, %133 : vector<8x128xf32>
    %135 = arith.mulf %134, %134 : vector<8x128xf32>
    %cst_42 = arith.constant dense<0.000000e+00> : vector<128xf32>
    %136 = vector.multi_reduction <add>, %135, %cst_42 [0] : vector<8x128xf32> to vector<128xf32>
    %137 = vector.shape_cast %136 : vector<128xf32> to vector<1x128xf32>
    %cst_43 = arith.constant 8.000000e+00 : f32
    %138 = vector.broadcast %cst_43 : f32 to vector<1x128xf32>
    %139 = arith.divf %137, %138 : vector<1x128xf32>
    %cst_44 = arith.constant 9.99999974E-6 : f32
    %140 = vector.broadcast %cst_44 : f32 to vector<1x128xf32>
    %141 = arith.addf %139, %140 : vector<1x128xf32>
    %142 = math.rsqrt %141 : vector<1x128xf32>
    %143 = vector.broadcast %142 : vector<1x128xf32> to vector<8x128xf32>
    %144 = arith.mulf %134, %143 : vector<8x128xf32>
    %145 = vector.extract_strided_slice %91 {offsets = [24, 0], sizes = [8, 128], strides = [1, 1]} : vector<32x128xf32> to vector<8x128xf32>
    %cst_45 = arith.constant dense<0.000000e+00> : vector<128xf32>
    %146 = vector.multi_reduction <add>, %145, %cst_45 [0] : vector<8x128xf32> to vector<128xf32>
    %147 = vector.shape_cast %146 : vector<128xf32> to vector<1x128xf32>
    %cst_46 = arith.constant 8.000000e+00 : f32
    %148 = vector.broadcast %cst_46 : f32 to vector<1x128xf32>
    %149 = arith.divf %147, %148 : vector<1x128xf32>
    %150 = vector.broadcast %149 : vector<1x128xf32> to vector<8x128xf32>
    %151 = arith.subf %145, %150 : vector<8x128xf32>
    %152 = arith.mulf %151, %151 : vector<8x128xf32>
    %cst_47 = arith.constant dense<0.000000e+00> : vector<128xf32>
    %153 = vector.multi_reduction <add>, %152, %cst_47 [0] : vector<8x128xf32> to vector<128xf32>
    %154 = vector.shape_cast %153 : vector<128xf32> to vector<1x128xf32>
    %cst_48 = arith.constant 8.000000e+00 : f32
    %155 = vector.broadcast %cst_48 : f32 to vector<1x128xf32>
    %156 = arith.divf %154, %155 : vector<1x128xf32>
    %cst_49 = arith.constant 9.99999974E-6 : f32
    %157 = vector.broadcast %cst_49 : f32 to vector<1x128xf32>
    %158 = arith.addf %156, %157 : vector<1x128xf32>
    %159 = math.rsqrt %158 : vector<1x128xf32>
    %160 = vector.broadcast %159 : vector<1x128xf32> to vector<8x128xf32>
    %161 = arith.mulf %151, %160 : vector<8x128xf32>
    %162 = tpu.concatenate %110, %127, %144, %161 in 0 : vector<8x128xf32>, vector<8x128xf32>, vector<8x128xf32>, vector<8x128xf32> -> vector<32x128xf32>
    %163 = vector.broadcast %92 : vector<32x1xf32> to vector<32x128xf32>
    %164 = arith.mulf %162, %163 : vector<32x128xf32>
    %165 = vector.broadcast %93 : vector<32x1xf32> to vector<32x128xf32>
    %166 = arith.addf %164, %165 : vector<32x128xf32>
    %167 = vector.extract_strided_slice %2 {offsets = [32, 0], sizes = [32, 32], strides = [1, 1]} : vector<96x32xf32> to vector<32x32xf32>
    %cst_50 = arith.constant dense<0.000000e+00> : vector<32x128xf32>
    %168 = tpu.matmul %167, %166, %cst_50 {dimension_numbers = #tpu.dot_dimension_numbers<[1], [0], [0], [1], [0, 0, 1, 1], [], []>} : vector<32x32xf32>, vector<32x128xf32>, vector<32x128xf32> -> vector<32x128xf32>
    %169 = vector.extract_strided_slice %3 {offsets = [0, 6], sizes = [32, 1], strides = [1, 1]} : vector<32x12xf32> to vector<32x1xf32>
    %170 = vector.broadcast %169 : vector<32x1xf32> to vector<32x128xf32>
    %171 = arith.addf %168, %170 : vector<32x128xf32>
    %cst_51 = arith.constant 0.000000e+00 : f32
    %172 = vector.broadcast %cst_51 : f32 to vector<32x128xf32>
    %173 = arith.maximumf %171, %172 : vector<32x128xf32>
    %174 = vector.extract_strided_slice %3 {offsets = [0, 7], sizes = [32, 1], strides = [1, 1]} : vector<32x12xf32> to vector<32x1xf32>
    %175 = vector.extract_strided_slice %3 {offsets = [0, 8], sizes = [32, 1], strides = [1, 1]} : vector<32x12xf32> to vector<32x1xf32>
    %cst_52 = arith.constant dense<0.000000e+00> : vector<128xf32>
    %176 = vector.multi_reduction <add>, %173, %cst_52 [0] : vector<32x128xf32> to vector<128xf32>
    %177 = vector.shape_cast %176 : vector<128xf32> to vector<1x128xf32>
    %cst_53 = arith.constant 3.200000e+01 : f32
    %178 = vector.broadcast %cst_53 : f32 to vector<1x128xf32>
    %179 = arith.divf %177, %178 : vector<1x128xf32>
    %180 = vector.broadcast %179 : vector<1x128xf32> to vector<32x128xf32>
    %181 = arith.subf %173, %180 : vector<32x128xf32>
    %182 = arith.mulf %181, %181 : vector<32x128xf32>
    %cst_54 = arith.constant dense<0.000000e+00> : vector<128xf32>
    %183 = vector.multi_reduction <add>, %182, %cst_54 [0] : vector<32x128xf32> to vector<128xf32>
    %184 = vector.shape_cast %183 : vector<128xf32> to vector<1x128xf32>
    %cst_55 = arith.constant 3.200000e+01 : f32
    %185 = vector.broadcast %cst_55 : f32 to vector<1x128xf32>
    %186 = arith.divf %184, %185 : vector<1x128xf32>
    %cst_56 = arith.constant 9.99999974E-6 : f32
    %187 = vector.broadcast %cst_56 : f32 to vector<1x128xf32>
    %188 = arith.addf %186, %187 : vector<1x128xf32>
    %189 = math.rsqrt %188 : vector<1x128xf32>
    %190 = vector.broadcast %189 : vector<1x128xf32> to vector<32x128xf32>
    %191 = arith.mulf %181, %190 : vector<32x128xf32>
    %192 = vector.broadcast %174 : vector<32x1xf32> to vector<32x128xf32>
    %193 = arith.mulf %191, %192 : vector<32x128xf32>
    %194 = vector.broadcast %175 : vector<32x1xf32> to vector<32x128xf32>
    %195 = arith.addf %193, %194 : vector<32x128xf32>
    %196 = vector.extract_strided_slice %2 {offsets = [64, 0], sizes = [32, 32], strides = [1, 1]} : vector<96x32xf32> to vector<32x32xf32>
    %cst_57 = arith.constant dense<0.000000e+00> : vector<32x128xf32>
    %197 = tpu.matmul %196, %195, %cst_57 {dimension_numbers = #tpu.dot_dimension_numbers<[1], [0], [0], [1], [0, 0, 1, 1], [], []>} : vector<32x32xf32>, vector<32x128xf32>, vector<32x128xf32> -> vector<32x128xf32>
    %198 = vector.extract_strided_slice %3 {offsets = [0, 9], sizes = [32, 1], strides = [1, 1]} : vector<32x12xf32> to vector<32x1xf32>
    %199 = vector.broadcast %198 : vector<32x1xf32> to vector<32x128xf32>
    %200 = arith.addf %197, %199 : vector<32x128xf32>
    %cst_58 = arith.constant 0.000000e+00 : f32
    %201 = vector.broadcast %cst_58 : f32 to vector<32x128xf32>
    %202 = arith.maximumf %200, %201 : vector<32x128xf32>
    %203 = vector.extract_strided_slice %3 {offsets = [0, 10], sizes = [32, 1], strides = [1, 1]} : vector<32x12xf32> to vector<32x1xf32>
    %204 = vector.extract_strided_slice %3 {offsets = [0, 11], sizes = [32, 1], strides = [1, 1]} : vector<32x12xf32> to vector<32x1xf32>
    %cst_59 = arith.constant dense<0.000000e+00> : vector<128xf32>
    %205 = vector.multi_reduction <add>, %202, %cst_59 [0] : vector<32x128xf32> to vector<128xf32>
    %206 = vector.shape_cast %205 : vector<128xf32> to vector<1x128xf32>
    %cst_60 = arith.constant 3.200000e+01 : f32
    %207 = vector.broadcast %cst_60 : f32 to vector<1x128xf32>
    %208 = arith.divf %206, %207 : vector<1x128xf32>
    %209 = vector.broadcast %208 : vector<1x128xf32> to vector<32x128xf32>
    %210 = arith.subf %202, %209 : vector<32x128xf32>
    %211 = arith.mulf %210, %210 : vector<32x128xf32>
    %cst_61 = arith.constant dense<0.000000e+00> : vector<128xf32>
    %212 = vector.multi_reduction <add>, %211, %cst_61 [0] : vector<32x128xf32> to vector<128xf32>
    %213 = vector.shape_cast %212 : vector<128xf32> to vector<1x128xf32>
    %cst_62 = arith.constant 3.200000e+01 : f32
    %214 = vector.broadcast %cst_62 : f32 to vector<1x128xf32>
    %215 = arith.divf %213, %214 : vector<1x128xf32>
    %cst_63 = arith.constant 9.99999974E-6 : f32
    %216 = vector.broadcast %cst_63 : f32 to vector<1x128xf32>
    %217 = arith.addf %215, %216 : vector<1x128xf32>
    %218 = math.rsqrt %217 : vector<1x128xf32>
    %219 = vector.broadcast %218 : vector<1x128xf32> to vector<32x128xf32>
    %220 = arith.mulf %210, %219 : vector<32x128xf32>
    %221 = vector.broadcast %203 : vector<32x1xf32> to vector<32x128xf32>
    %222 = arith.mulf %220, %221 : vector<32x128xf32>
    %223 = vector.broadcast %204 : vector<32x1xf32> to vector<32x128xf32>
    %224 = arith.addf %222, %223 : vector<32x128xf32>
    %c0_64 = arith.constant 0 : index
    %c0_65 = arith.constant 0 : index
    %225 = vector.load %arg5[%c0_64, %c0_65] : memref<32x128xf32, #tpu.memory_space<vmem>>, vector<32x128xf32>
    tpu.vector_store %arg5[%c0_64, %c0_65], %224 {strides = array<i32>} : memref<32x128xf32, #tpu.memory_space<vmem>>, vector<32x128xf32>,
    return
  }
  func.func @transform_0(%arg0: i32) -> (i32, i32) {
    %c0_i32 = arith.constant 0 : i32
    %c0_i32_0 = arith.constant 0 : i32
    return %c0_i32, %arg0 : i32, i32
  }
  func.func @transform_1(%arg0: i32) -> (i32, i32) {
    %c0_i32 = arith.constant 0 : i32
    %c0_i32_0 = arith.constant 0 : i32
    %c0_i32_1 = arith.constant 0 : i32
    return %c0_i32, %c0_i32_0 : i32, i32
  }
  func.func @transform_2(%arg0: i32) -> (i32, i32) {
    %c0_i32 = arith.constant 0 : i32
    %c0_i32_0 = arith.constant 0 : i32
    %c0_i32_1 = arith.constant 0 : i32
    return %c0_i32, %c0_i32_0 : i32, i32
  }
  func.func @transform_3(%arg0: i32) -> (i32, i32) {
    %c0_i32 = arith.constant 0 : i32
    %c0_i32_0 = arith.constant 0 : i32
    %c0_i32_1 = arith.constant 0 : i32
    return %c0_i32, %c0_i32_0 : i32, i32
  }
  func.func @transform_4(%arg0: i32) -> (i32, i32) {
    %c0_i32 = arith.constant 0 : i32
    %c0_i32_0 = arith.constant 0 : i32
    return %c0_i32, %arg0 : i32, i32
  }
}

</mosaic_0001>

<llo_original>
// kernel: tpu_custom_call.1
$region0: #{tpu_custom_call.1}
  #allocation0 [shape = 'u32[]', space=smem, size = 0x4, offset = 0x4, fixed_abs, tag = 'smem constant byte address 0x4 - core index']
  #allocation1 [shape = 'u32[144,128]{1,0:T(1,128)}', space=vmem, size = 0x12000, scoped, tag = 'internal scratch']
  %s0 = inlined_call_operand.vmem [shape: f32[10,128], index: 0, kind: input, shape index: {}]
  %s1 = inlined_call_operand.vmem [shape: f32[32,10], index: 1, kind: input, shape index: {}]
  %s2 = inlined_call_operand.vmem [shape: f32[96,32], index: 2, kind: input, shape index: {}]
  %s3 = inlined_call_operand.vmem [shape: f32[32,12], index: 3, kind: input, shape index: {}]
  %s4 = inlined_call_operand.hbm [shape: f32[32,128], index: 4, kind: output, shape index: {}]
  %s5 = sld [smem:[#allocation0]]
  $region26: #{tpu_custom_call.1} parent=0
    _
  %s7 = ssub.s32 1, %s5
  %s8 = scalar_select 0, %s7, %s5
  $region1: #{tpu_custom_call.1} parent=0
    #allocation2 [shape = 'u8[16384]{0}', space=vmem, size = 0x4000, scoped, tag = 'output window, operand 0, single buffered']
    #allocation3 [shape = 's32[1]{0}', space=sflag, size = 0x4, scoped, tag = 'scoped memory for tpu_custom_call.1']
    %9 = vsyncpa [#allocation3], 0
    // Predicated region
    $region2: #{tpu_custom_call.1} parent=1 // pred_check
      _
    $region3: #{tpu_custom_call.1} parent=1 // pred_check_branch
      %11 = sbr.rel (0) target = $region5
    $region4: #{tpu_custom_call.1} parent=1 // pred_region
      _
    $region5: #{tpu_custom_call.1} parent=1 // pred_fallthru
      _
    // Predicated region
    $region6: #{tpu_custom_call.1} parent=1 // pred_check
      _
    $region7: #{tpu_custom_call.1} parent=1 // pred_check_branch
      %13 = sbr.rel (0) target = $region9
    $region8: #{tpu_custom_call.1} parent=1 // pred_region
      _
    $region9: #{tpu_custom_call.1} parent=1 // pred_fallthru
      _
    // Predicated region
    $region10: #{tpu_custom_call.1} parent=1 // pred_check
      _
    $region11: #{tpu_custom_call.1} parent=1 // pred_check_branch
      %15 = sbr.rel (0) target = $region13
    $region12: #{tpu_custom_call.1} parent=1 // pred_region
      _
    $region13: #{tpu_custom_call.1} parent=1 // pred_fallthru
      _
    // Predicated region
    $region14: #{tpu_custom_call.1} parent=1 // pred_check
      _
    $region15: #{tpu_custom_call.1} parent=1 // pred_check_branch
      %17 = sbr.rel (0) target = $region17
    $region16: #{tpu_custom_call.1} parent=1 // pred_region
      _
    $region17: #{tpu_custom_call.1} parent=1 // pred_fallthru
      _
    %v18 = vld [vmem:[%s0] sm:$0xff]
    %v19 = vld [vmem:[%s0 + $0x8] sm:$0x3]
    %v20 = vld [vmem:[%s1] sm:$0xff]
    %v21 = vld [vmem:[%s1 + $0x8] sm:$0xff]
    %v22 = vld [vmem:[%s1 + $0x10] sm:$0xff]
    %v23 = vld [vmem:[%s1 + $0x18] sm:$0xff]
    %v24 = vld [vmem:[%s2] sm:$0xff]
    %v25 = vld [vmem:[%s2 + $0x8] sm:$0xff]
    %v26 = vld [vmem:[%s2 + $0x10] sm:$0xff]
    %v27 = vld [vmem:[%s2 + $0x18] sm:$0xff]
    %v28 = vld [vmem:[%s2 + $0x20] sm:$0xff]
    %v29 = vld [vmem:[%s2 + $0x28] sm:$0xff]
    %v30 = vld [vmem:[%s2 + $0x30] sm:$0xff]
    %v31 = vld [vmem:[%s2 + $0x38] sm:$0xff]
    %v32 = vld [vmem:[%s2 + $0x40] sm:$0xff]
    %v33 = vld [vmem:[%s2 + $0x48] sm:$0xff]
    %v34 = vld [vmem:[%s2 + $0x50] sm:$0xff]
    %v35 = vld [vmem:[%s2 + $0x58] sm:$0xff]
    %v36 = vld [vmem:[%s3] sm:$0xff]
    %v37 = vld [vmem:[%s3 + $0x8] sm:$0xff]
    %v38 = vld [vmem:[%s3 + $0x10] sm:$0xff]
    %v39 = vld [vmem:[%s3 + $0x18] sm:$0xff]
    %41 = vset.pattern.permute.xlu0 0
    %42 = vperm.xlu0 %41, %v36
    %v43 = vpop.permute.xlu0 %42
    %46 = vset.pattern.permute.xlu0 0
    %47 = vperm.xlu0 %46, %v37
    %v48 = vpop.permute.xlu0 %47
    %51 = vset.pattern.permute.xlu0 0
    %52 = vperm.xlu0 %51, %v38
    %v53 = vpop.permute.xlu0 %52
    %56 = vset.pattern.permute.xlu0 0
    %57 = vperm.xlu0 %56, %v39
    %v58 = vpop.permute.xlu0 %57
    %vm60 = vcmask 80896
    %v62 = vsel %vm60, %v20, 0
    %v65 = vsel %vm60, %v21, 0
    %v68 = vsel %vm60, %v22, 0
    %v71 = vsel %vm60, %v23, 0
    %vm73 = vcmask 1041408
    %v75 = vsel %vm73, %v19, 0
    %77 = vmatprep.subr.mxu0 0.0
    %78 = vmatpush1.msra.mxu0 0.0
    %79 = vmatprep.subr.mxu0 0.0
    %80 = vmatpush1.msra.mxu0 0.0
    %81 = vmatprep.subr.mxu0 0.0
    %82 = vmatpush1.msra.mxu0 0.0
    %83 = vmatprep.subr.mxu0 0.0
    %84 = vmatpush1.msra.mxu0 0.0
    %85 = vmatprep.subr.mxu0 0.0
    %86 = vmatpush1.msra.mxu0 0.0
    %87 = vmatprep.subr.mxu0 0.0
    %88 = vmatpush1.msra.mxu0 0.0
    %89 = vmatprep.subr.mxu0 0.0
    %90 = vmatpush1.msra.mxu0 0.0
    %91 = vmatprep.subr.mxu0 0.0
    %92 = vmatpush1.msra.mxu0 0.0
    %93 = vmatprep.subr.mxu0 0.0
    %94 = vmatpush1.msra.mxu0 0.0
    %95 = vmatprep.subr.mxu0 0.0
    %96 = vmatpush1.msra.mxu0 0.0
    %97 = vmatprep.subr.mxu0 0.0
    %98 = vmatpush1.msra.mxu0 0.0
    %99 = vmatprep.subr.mxu0 0.0
    %100 = vmatpush1.msra.mxu0 0.0
    %101 = vmatprep.subr.mxu0 0.0
    %102 = vmatpush1.msra.mxu0 0.0
    %103 = vmatprep.subr.mxu0 0.0
    %104 = vmatpush1.msra.mxu0 0.0
    %105 = vmatprep.subr.mxu0 0.0
    %106 = vmatpush1.msra.mxu0 %v75
    %107 = vmatprep.subr.mxu0 0.0
    %108 = vmatpush1.msra.mxu0 %v18
    %109 = vmatprep.subr.mxu0 0.0
    %110 = vmatpush2.msra.mxu0 0.0
    %111 = vmatprep.subr.mxu0 0.0
    %112 = vmatpush2.msra.mxu0 0.0
    %113 = vmatprep.subr.mxu0 0.0
    %114 = vmatpush2.msra.mxu0 0.0
    %115 = vmatprep.subr.mxu0 0.0
    %116 = vmatpush2.msra.mxu0 0.0
    %117 = vmatprep.subr.mxu0 0.0
    %118 = vmatpush2.msra.mxu0 0.0
    %119 = vmatprep.subr.mxu0 0.0
    %120 = vmatpush2.msra.mxu0 0.0
    %121 = vmatprep.subr.mxu0 0.0
    %122 = vmatpush2.msra.mxu0 0.0
    %123 = vmatprep.subr.mxu0 0.0
    %124 = vmatpush2.msra.mxu0 0.0
    %125 = vmatprep.subr.mxu0 0.0
    %126 = vmatpush2.msra.mxu0 0.0
    %127 = vmatprep.subr.mxu0 0.0
    %128 = vmatpush2.msra.mxu0 0.0
    %129 = vmatprep.subr.mxu0 0.0
    %130 = vmatpush2.msra.mxu0 0.0
    %131 = vmatprep.subr.mxu0 0.0
    %132 = vmatpush2.msra.mxu0 0.0
    %133 = vmatprep.subr.mxu0 0.0
    %134 = vmatpush2.msra.mxu0 0.0
    %135 = vmatprep.subr.mxu0 0.0
    %136 = vmatpush2.msra.mxu0 0.0
    %137 = vmatprep.subr.mxu0 0.0
    %138 = vmatpush2.msra.mxu0 0.0
    %139 = vmatprep.subr.mxu0 0.0
    %140 = vmatpush2.msra.mxu0 0.0
    %141 = vmatprep.mubr.f32.mxu0 0.0
    %142 = vmatmul.mubr.f32.gmra.mxu0 %v62
    %v143 = vpop.f32.mrf.mxu0
    %v144 = vadd.f32 %v43, %v143
    %v145 = vpop.f32.mrf.mxu0
    %146 = vmatprep.mubr.f32.mxu0 0.0
    %147 = vmatmul.mubr.f32.gmra.mxu0 %v65
    %v148 = vpop.f32.mrf.mxu0
    %v149 = vadd.f32 %v48, %v148
    %v150 = vpop.f32.mrf.mxu0
    %151 = vmatprep.mubr.f32.mxu0 0.0
    %152 = vmatmul.mubr.f32.gmra.mxu0 %v68
    %v153 = vpop.f32.mrf.mxu0
    %v154 = vadd.f32 %v53, %v153
    %v155 = vpop.f32.mrf.mxu0
    %156 = vmatprep.mubr.f32.mxu0 0.0
    %157 = vmatmul.mubr.f32.gmra.mxu0 %v71
    %v158 = vpop.f32.mrf.mxu0
    %v159 = vadd.f32 %v58, %v158
    %v160 = vpop.f32.mrf.mxu0
    %161 = vdwg.mxu0
    %v162 = vmax.f32 %v144, 0.0
    %v163 = vmax.f32 %v149, 0.0
    %v164 = vmax.f32 %v154, 0.0
    %v165 = vmax.f32 %v159, 0.0
    %v166 = vrot.slane %v162, 4
    %v167 = vadd.f32 %v162, %v166
    %v168 = vrot.slane %v167, 2
    %v169 = vadd.f32 %v167, %v168
    %v170 = vrot.slane %v169, 1
    %v171 = vadd.f32 %v169, %v170
    %v172 = vrcp.pop 8.0
    %v173 = vmul.f32 %v171, %v172
    %v174 = vsub.f32 %v162, %v173
    %v175 = vmul.f32 %v174, %v174
    %v176 = vrot.slane %v175, 4
    %v177 = vadd.f32 %v175, %v176
    %v178 = vrot.slane %v177, 2
    %v179 = vadd.f32 %v177, %v178
    %v180 = vrot.slane %v179, 1
    %v181 = vadd.f32 %v179, %v180
    %v182 = vmul.f32 %v181, %v172
    %v183 = vadd.f32 %v182, 1e-05
    %v184 = vrsqrt.pop %v183
    %v185 = vmul.f32 %v174, %v184
    %v186 = vrot.slane %v163, 4
    %v187 = vadd.f32 %v163, %v186
    %v188 = vrot.slane %v187, 2
    %v189 = vadd.f32 %v187, %v188
    %v190 = vrot.slane %v189, 1
    %v191 = vadd.f32 %v189, %v190
    %v192 = vmul.f32 %v191, %v172
    %v193 = vsub.f32 %v163, %v192
    %v194 = vmul.f32 %v193, %v193
    %v195 = vrot.slane %v194, 4
    %v196 = vadd.f32 %v194, %v195
    %v197 = vrot.slane %v196, 2
    %v198 = vadd.f32 %v196, %v197
    %v199 = vrot.slane %v198, 1
    %v200 = vadd.f32 %v198, %v199
    %v201 = vmul.f32 %v200, %v172
    %v202 = vadd.f32 %v201, 1e-05
    %v203 = vrsqrt.pop %v202
    %v204 = vmul.f32 %v193, %v203
    %v205 = vrot.slane %v164, 4
    %v206 = vadd.f32 %v164, %v205
    %v207 = vrot.slane %v206, 2
    %v208 = vadd.f32 %v206, %v207
    %v209 = vrot.slane %v208, 1
    %v210 = vadd.f32 %v208, %v209
    %v211 = vmul.f32 %v210, %v172
    %v212 = vsub.f32 %v164, %v211
    %v213 = vmul.f32 %v212, %v212
    %v214 = vrot.slane %v213, 4
    %v215 = vadd.f32 %v213, %v214
    %v216 = vrot.slane %v215, 2
    %v217 = vadd.f32 %v215, %v216
    %v218 = vrot.slane %v217, 1
    %v219 = vadd.f32 %v217, %v218
    %v220 = vmul.f32 %v219, %v172
    %v221 = vadd.f32 %v220, 1e-05
    %v222 = vrsqrt.pop %v221
    %v223 = vmul.f32 %v212, %v222
    %v224 = vrot.slane %v165, 4
    %v225 = vadd.f32 %v165, %v224
    %v226 = vrot.slane %v225, 2
    %v227 = vadd.f32 %v225, %v226
    %v228 = vrot.slane %v227, 1
    %v229 = vadd.f32 %v227, %v228
    %v230 = vmul.f32 %v229, %v172
    %v231 = vsub.f32 %v165, %v230
    %v232 = vmul.f32 %v231, %v231
    %v233 = vrot.slane %v232, 4
    %v234 = vadd.f32 %v232, %v233
    %v235 = vrot.slane %v234, 2
    %v236 = vadd.f32 %v234, %v235
    %v237 = vrot.slane %v236, 1
    %v238 = vadd.f32 %v236, %v237
    %v239 = vmul.f32 %v238, %v172
    %v240 = vadd.f32 %v239, 1e-05
    %v241 = vrsqrt.pop %v240
    %v242 = vmul.f32 %v231, %v241
    %243 = vset.pattern.permute.xlu0 1
    %244 = vperm.xlu0 %243, %v36
    %v245 = vpop.permute.xlu0 %244
    %247 = vset.pattern.permute.xlu0 1
    %248 = vperm.xlu0 %247, %v37
    %v249 = vpop.permute.xlu0 %248
    %251 = vset.pattern.permute.xlu0 1
    %252 = vperm.xlu0 %251, %v38
    %v253 = vpop.permute.xlu0 %252
    %255 = vset.pattern.permute.xlu0 1
    %256 = vperm.xlu0 %255, %v39
    %v257 = vpop.permute.xlu0 %256
    %v259 = vmul.f32 %v185, %v245
    %v260 = vmul.f32 %v204, %v249
    %v261 = vmul.f32 %v223, %v253
    %v262 = vmul.f32 %v242, %v257
    %263 = vset.pattern.permute.xlu0 2
    %264 = vperm.xlu0 %263, %v36
    %v265 = vpop.permute.xlu0 %264
    %267 = vset.pattern.permute.xlu0 2
    %268 = vperm.xlu0 %267, %v37
    %v269 = vpop.permute.xlu0 %268
    %271 = vset.pattern.permute.xlu0 2
    %272 = vperm.xlu0 %271, %v38
    %v273 = vpop.permute.xlu0 %272
    %275 = vset.pattern.permute.xlu0 2
    %276 = vperm.xlu0 %275, %v39
    %v277 = vpop.permute.xlu0 %276
    %v279 = vadd.f32 %v259, %v265
    %v280 = vadd.f32 %v260, %v269
    %v281 = vadd.f32 %v261, %v273
    %v282 = vadd.f32 %v262, %v277
    %283 = vset.pattern.permute.xlu0 3
    %284 = vperm.xlu0 %283, %v36
    %v285 = vpop.permute.xlu0 %284
    %287 = vset.pattern.permute.xlu0 3
    %288 = vperm.xlu0 %287, %v37
    %v289 = vpop.permute.xlu0 %288
    %291 = vset.pattern.permute.xlu0 3
    %292 = vperm.xlu0 %291, %v38
    %v293 = vpop.permute.xlu0 %292
    %295 = vset.pattern.permute.xlu0 3
    %296 = vperm.xlu0 %295, %v39
    %v297 = vpop.permute.xlu0 %296
    %vm299 = vcmask 261120
    %v301 = vsel %vm299, %v24, 0
    %v304 = vsel %vm299, %v25, 0
    %v307 = vsel %vm299, %v26, 0
    %v310 = vsel %vm299, %v27, 0
    %312 = vmatprep.subr.mxu0 0.0
    %313 = vmatpush1.msra.mxu0 0.0
    %314 = vmatprep.subr.mxu0 0.0
    %315 = vmatpush1.msra.mxu0 0.0
    %316 = vmatprep.subr.mxu0 0.0
    %317 = vmatpush1.msra.mxu0 0.0
    %318 = vmatprep.subr.mxu0 0.0
    %319 = vmatpush1.msra.mxu0 0.0
    %320 = vmatprep.subr.mxu0 0.0
    %321 = vmatpush1.msra.mxu0 0.0
    %322 = vmatprep.subr.mxu0 0.0
    %323 = vmatpush1.msra.mxu0 0.0
    %324 = vmatprep.subr.mxu0 0.0
    %325 = vmatpush1.msra.mxu0 0.0
    %326 = vmatprep.subr.mxu0 0.0
    %327 = vmatpush1.msra.mxu0 0.0
    %328 = vmatprep.subr.mxu0 0.0
    %329 = vmatpush1.msra.mxu0 0.0
    %330 = vmatprep.subr.mxu0 0.0
    %331 = vmatpush1.msra.mxu0 0.0
    %332 = vmatprep.subr.mxu0 0.0
    %333 = vmatpush1.msra.mxu0 0.0
    %334 = vmatprep.subr.mxu0 0.0
    %335 = vmatpush1.msra.mxu0 0.0
    %336 = vmatprep.subr.mxu0 0.0
    %337 = vmatpush1.msra.mxu0 %v282
    %338 = vmatprep.subr.mxu0 0.0
    %339 = vmatpush1.msra.mxu0 %v281
    %340 = vmatprep.subr.mxu0 0.0
    %341 = vmatpush1.msra.mxu0 %v280
    %342 = vmatprep.subr.mxu0 0.0
    %343 = vmatpush1.msra.mxu0 %v279
    %344 = vmatprep.subr.mxu0 0.0
    %345 = vmatpush2.msra.mxu0 0.0
    %346 = vmatprep.subr.mxu0 0.0
    %347 = vmatpush2.msra.mxu0 0.0
    %348 = vmatprep.subr.mxu0 0.0
    %349 = vmatpush2.msra.mxu0 0.0
    %350 = vmatprep.subr.mxu0 0.0
    %351 = vmatpush2.msra.mxu0 0.0
    %352 = vmatprep.subr.mxu0 0.0
    %353 = vmatpush2.msra.mxu0 0.0
    %354 = vmatprep.subr.mxu0 0.0
    %355 = vmatpush2.msra.mxu0 0.0
    %356 = vmatprep.subr.mxu0 0.0
    %357 = vmatpush2.msra.mxu0 0.0
    %358 = vmatprep.subr.mxu0 0.0
    %359 = vmatpush2.msra.mxu0 0.0
    %360 = vmatprep.subr.mxu0 0.0
    %361 = vmatpush2.msra.mxu0 0.0
    %362 = vmatprep.subr.mxu0 0.0
    %363 = vmatpush2.msra.mxu0 0.0
    %364 = vmatprep.subr.mxu0 0.0
    %365 = vmatpush2.msra.mxu0 0.0
    %366 = vmatprep.subr.mxu0 0.0
    %367 = vmatpush2.msra.mxu0 0.0
    %368 = vmatprep.subr.mxu0 0.0
    %369 = vmatpush2.msra.mxu0 0.0
    %370 = vmatprep.subr.mxu0 0.0
    %371 = vmatpush2.msra.mxu0 0.0
    %372 = vmatprep.subr.mxu0 0.0
    %373 = vmatpush2.msra.mxu0 0.0
    %374 = vmatprep.subr.mxu0 0.0
    %375 = vmatpush2.msra.mxu0 0.0
    %376 = vmatprep.mubr.f32.mxu0 0.0
    %377 = vmatmul.mubr.f32.gmra.mxu0 %v301
    %v378 = vpop.f32.mrf.mxu0
    %v379 = vadd.f32 %v285, %v378
    %v380 = vpop.f32.mrf.mxu0
    %381 = vmatprep.mubr.f32.mxu0 0.0
    %382 = vmatmul.mubr.f32.gmra.mxu0 %v304
    %v383 = vpop.f32.mrf.mxu0
    %v384 = vadd.f32 %v289, %v383
    %v385 = vpop.f32.mrf.mxu0
    %386 = vmatprep.mubr.f32.mxu0 0.0
    %387 = vmatmul.mubr.f32.gmra.mxu0 %v307
    %v388 = vpop.f32.mrf.mxu0
    %v389 = vadd.f32 %v293, %v388
    %v390 = vpop.f32.mrf.mxu0
    %391 = vmatprep.mubr.f32.mxu0 0.0
    %392 = vmatmul.mubr.f32.gmra.mxu0 %v310
    %v393 = vpop.f32.mrf.mxu0
    %v394 = vadd.f32 %v297, %v393
    %v395 = vpop.f32.mrf.mxu0
    %396 = vdwg.mxu0
    %v397 = vmax.f32 %v379, 0.0
    %v398 = vmax.f32 %v384, 0.0
    %v399 = vmax.f32 %v389, 0.0
    %v400 = vmax.f32 %v394, 0.0
    %v401 = vrot.slane %v397, 4
    %v402 = vadd.f32 %v397, %v401
    %v403 = vrot.slane %v402, 2
    %v404 = vadd.f32 %v402, %v403
    %v405 = vrot.slane %v404, 1
    %v406 = vadd.f32 %v404, %v405
    %v407 = vmul.f32 %v406, %v172
    %v408 = vsub.f32 %v397, %v407
    %v409 = vmul.f32 %v408, %v408
    %v410 = vrot.slane %v409, 4
    %v411 = vadd.f32 %v409, %v410
    %v412 = vrot.slane %v411, 2
    %v413 = vadd.f32 %v411, %v412
    %v414 = vrot.slane %v413, 1
    %v415 = vadd.f32 %v413, %v414
    %v416 = vmul.f32 %v415, %v172
    %v417 = vadd.f32 %v416, 1e-05
    %v418 = vrsqrt.pop %v417
    %v419 = vmul.f32 %v408, %v418
    %v420 = vrot.slane %v398, 4
    %v421 = vadd.f32 %v398, %v420
    %v422 = vrot.slane %v421, 2
    %v423 = vadd.f32 %v421, %v422
    %v424 = vrot.slane %v423, 1
    %v425 = vadd.f32 %v423, %v424
    %v426 = vmul.f32 %v425, %v172
    %v427 = vsub.f32 %v398, %v426
    %v428 = vmul.f32 %v427, %v427
    %v429 = vrot.slane %v428, 4
    %v430 = vadd.f32 %v428, %v429
    %v431 = vrot.slane %v430, 2
    %v432 = vadd.f32 %v430, %v431
    %v433 = vrot.slane %v432, 1
    %v434 = vadd.f32 %v432, %v433
    %v435 = vmul.f32 %v434, %v172
    %v436 = vadd.f32 %v435, 1e-05
    %v437 = vrsqrt.pop %v436
    %v438 = vmul.f32 %v427, %v437
    %v439 = vrot.slane %v399, 4
    %v440 = vadd.f32 %v399, %v439
    %v441 = vrot.slane %v440, 2
    %v442 = vadd.f32 %v440, %v441
    %v443 = vrot.slane %v442, 1
    %v444 = vadd.f32 %v442, %v443
    %v445 = vmul.f32 %v444, %v172
    %v446 = vsub.f32 %v399, %v445
    %v447 = vmul.f32 %v446, %v446
    %v448 = vrot.slane %v447, 4
    %v449 = vadd.f32 %v447, %v448
    %v450 = vrot.slane %v449, 2
    %v451 = vadd.f32 %v449, %v450
    %v452 = vrot.slane %v451, 1
    %v453 = vadd.f32 %v451, %v452
    %v454 = vmul.f32 %v453, %v172
    %v455 = vadd.f32 %v454, 1e-05
    %v456 = vrsqrt.pop %v455
    %v457 = vmul.f32 %v446, %v456
    %v458 = vrot.slane %v400, 4
    %v459 = vadd.f32 %v400, %v458
    %v460 = vrot.slane %v459, 2
    %v461 = vadd.f32 %v459, %v460
    %v462 = vrot.slane %v461, 1
    %v463 = vadd.f32 %v461, %v462
    %v464 = vmul.f32 %v463, %v172
    %v465 = vsub.f32 %v400, %v464
    %v466 = vmul.f32 %v465, %v465
    %v467 = vrot.slane %v466, 4
    %v468 = vadd.f32 %v466, %v467
    %v469 = vrot.slane %v468, 2
    %v470 = vadd.f32 %v468, %v469
    %v471 = vrot.slane %v470, 1
    %v472 = vadd.f32 %v470, %v471
    %v473 = vmul.f32 %v472, %v172
    %v474 = vadd.f32 %v473, 1e-05
    %v475 = vrsqrt.pop %v474
    %v476 = vmul.f32 %v465, %v475
    %477 = vset.pattern.permute.xlu0 4
    %478 = vperm.xlu0 %477, %v36
    %v479 = vpop.permute.xlu0 %478
    %481 = vset.pattern.permute.xlu0 4
    %482 = vperm.xlu0 %481, %v37
    %v483 = vpop.permute.xlu0 %482
    %485 = vset.pattern.permute.xlu0 4
    %486 = vperm.xlu0 %485, %v38
    %v487 = vpop.permute.xlu0 %486
    %489 = vset.pattern.permute.xlu0 4
    %490 = vperm.xlu0 %489, %v39
    %v491 = vpop.permute.xlu0 %490
    %v493 = vmul.f32 %v419, %v479
    %v494 = vmul.f32 %v438, %v483
    %v495 = vmul.f32 %v457, %v487
    %v496 = vmul.f32 %v476, %v491
    %497 = vset.pattern.permute.xlu0 5
    %498 = vperm.xlu0 %497, %v36
    %v499 = vpop.permute.xlu0 %498
    %501 = vset.pattern.permute.xlu0 5
    %502 = vperm.xlu0 %501, %v37
    %v503 = vpop.permute.xlu0 %502
    %505 = vset.pattern.permute.xlu0 5
    %506 = vperm.xlu0 %505, %v38
    %v507 = vpop.permute.xlu0 %506
    %509 = vset.pattern.permute.xlu0 5
    %510 = vperm.xlu0 %509, %v39
    %v511 = vpop.permute.xlu0 %510
    %v513 = vadd.f32 %v493, %v499
    %v514 = vadd.f32 %v494, %v503
    %v515 = vadd.f32 %v495, %v507
    %v516 = vadd.f32 %v496, %v511
    %517 = vset.pattern.permute.xlu0 6
    %518 = vperm.xlu0 %517, %v36
    %v519 = vpop.permute.xlu0 %518
    %521 = vset.pattern.permute.xlu0 6
    %522 = vperm.xlu0 %521, %v37
    %v523 = vpop.permute.xlu0 %522
    %525 = vset.pattern.permute.xlu0 6
    %526 = vperm.xlu0 %525, %v38
    %v527 = vpop.permute.xlu0 %526
    %529 = vset.pattern.permute.xlu0 6
    %530 = vperm.xlu0 %529, %v39
    %v531 = vpop.permute.xlu0 %530
    %v534 = vsel %vm299, %v28, 0
    %v537 = vsel %vm299, %v29, 0
    %v540 = vsel %vm299, %v30, 0
    %v543 = vsel %vm299, %v31, 0
    %545 = vmatprep.subr.mxu0 0.0
    %546 = vmatpush1.msra.mxu0 0.0
    %547 = vmatprep.subr.mxu0 0.0
    %548 = vmatpush1.msra.mxu0 0.0
    %549 = vmatprep.subr.mxu0 0.0
    %550 = vmatpush1.msra.mxu0 0.0
    %551 = vmatprep.subr.mxu0 0.0
    %552 = vmatpush1.msra.mxu0 0.0
    %553 = vmatprep.subr.mxu0 0.0
    %554 = vmatpush1.msra.mxu0 0.0
    %555 = vmatprep.subr.mxu0 0.0
    %556 = vmatpush1.msra.mxu0 0.0
    %557 = vmatprep.subr.mxu0 0.0
    %558 = vmatpush1.msra.mxu0 0.0
    %559 = vmatprep.subr.mxu0 0.0
    %560 = vmatpush1.msra.mxu0 0.0
    %561 = vmatprep.subr.mxu0 0.0
    %562 = vmatpush1.msra.mxu0 0.0
    %563 = vmatprep.subr.mxu0 0.0
    %564 = vmatpush1.msra.mxu0 0.0
    %565 = vmatprep.subr.mxu0 0.0
    %566 = vmatpush1.msra.mxu0 0.0
    %567 = vmatprep.subr.mxu0 0.0
    %568 = vmatpush1.msra.mxu0 0.0
    %569 = vmatprep.subr.mxu0 0.0
    %570 = vmatpush1.msra.mxu0 %v516
    %571 = vmatprep.subr.mxu0 0.0
    %572 = vmatpush1.msra.mxu0 %v515
    %573 = vmatprep.subr.mxu0 0.0
    %574 = vmatpush1.msra.mxu0 %v514
    %575 = vmatprep.subr.mxu0 0.0
    %576 = vmatpush1.msra.mxu0 %v513
    %577 = vmatprep.subr.mxu0 0.0
    %578 = vmatpush2.msra.mxu0 0.0
    %579 = vmatprep.subr.mxu0 0.0
    %580 = vmatpush2.msra.mxu0 0.0
    %581 = vmatprep.subr.mxu0 0.0
    %582 = vmatpush2.msra.mxu0 0.0
    %583 = vmatprep.subr.mxu0 0.0
    %584 = vmatpush2.msra.mxu0 0.0
    %585 = vmatprep.subr.mxu0 0.0
    %586 = vmatpush2.msra.mxu0 0.0
    %587 = vmatprep.subr.mxu0 0.0
    %588 = vmatpush2.msra.mxu0 0.0
    %589 = vmatprep.subr.mxu0 0.0
    %590 = vmatpush2.msra.mxu0 0.0
    %591 = vmatprep.subr.mxu0 0.0
    %592 = vmatpush2.msra.mxu0 0.0
    %593 = vmatprep.subr.mxu0 0.0
    %594 = vmatpush2.msra.mxu0 0.0
    %595 = vmatprep.subr.mxu0 0.0
    %596 = vmatpush2.msra.mxu0 0.0
    %597 = vmatprep.subr.mxu0 0.0
    %598 = vmatpush2.msra.mxu0 0.0
    %599 = vmatprep.subr.mxu0 0.0
    %600 = vmatpush2.msra.mxu0 0.0
    %601 = vmatprep.subr.mxu0 0.0
    %602 = vmatpush2.msra.mxu0 0.0
    %603 = vmatprep.subr.mxu0 0.0
    %604 = vmatpush2.msra.mxu0 0.0
    %605 = vmatprep.subr.mxu0 0.0
    %606 = vmatpush2.msra.mxu0 0.0
    %607 = vmatprep.subr.mxu0 0.0
    %608 = vmatpush2.msra.mxu0 0.0
    %609 = vmatprep.mubr.f32.mxu0 0.0
    %610 = vmatmul.mubr.f32.gmra.mxu0 %v534
    %v611 = vpop.f32.mrf.mxu0
    %v612 = vadd.f32 %v519, %v611
    %v613 = vpop.f32.mrf.mxu0
    %614 = vmatprep.mubr.f32.mxu0 0.0
    %615 = vmatmul.mubr.f32.gmra.mxu0 %v537
    %v616 = vpop.f32.mrf.mxu0
    %v617 = vadd.f32 %v523, %v616
    %v618 = vpop.f32.mrf.mxu0
    %619 = vmatprep.mubr.f32.mxu0 0.0
    %620 = vmatmul.mubr.f32.gmra.mxu0 %v540
    %v621 = vpop.f32.mrf.mxu0
    %v622 = vadd.f32 %v527, %v621
    %v623 = vpop.f32.mrf.mxu0
    %624 = vmatprep.mubr.f32.mxu0 0.0
    %625 = vmatmul.mubr.f32.gmra.mxu0 %v543
    %v626 = vpop.f32.mrf.mxu0
    %v627 = vadd.f32 %v531, %v626
    %v628 = vpop.f32.mrf.mxu0
    %629 = vdwg.mxu0
    %v630 = vmax.f32 %v612, 0.0
    %v631 = vmax.f32 %v617, 0.0
    %v632 = vmax.f32 %v622, 0.0
    %v633 = vmax.f32 %v627, 0.0
    %v634 = vadd.f32 %v630, %v631
    %v635 = vadd.f32 %v634, %v632
    %v636 = vadd.f32 %v635, %v633
    %v637 = vrot.slane %v636, 4
    %v638 = vadd.f32 %v636, %v637
    %v639 = vrot.slane %v638, 2
    %v640 = vadd.f32 %v638, %v639
    %v641 = vrot.slane %v640, 1
    %v642 = vadd.f32 %v640, %v641
    %v643 = vrcp.pop 32.0
    %v644 = vmul.f32 %v642, %v643
    %v645 = vsub.f32 %v630, %v644
    %v646 = vsub.f32 %v631, %v644
    %v647 = vsub.f32 %v632, %v644
    %v648 = vsub.f32 %v633, %v644
    %v649 = vmul.f32 %v645, %v645
    %v650 = vmul.f32 %v646, %v646
    %v651 = vmul.f32 %v647, %v647
    %v652 = vmul.f32 %v648, %v648
    %v653 = vadd.f32 %v649, %v650
    %v654 = vadd.f32 %v653, %v651
    %v655 = vadd.f32 %v654, %v652
    %v656 = vrot.slane %v655, 4
    %v657 = vadd.f32 %v655, %v656
    %v658 = vrot.slane %v657, 2
    %v659 = vadd.f32 %v657, %v658
    %v660 = vrot.slane %v659, 1
    %v661 = vadd.f32 %v659, %v660
    %v662 = vmul.f32 %v661, %v643
    %v663 = vadd.f32 %v662, 1e-05
    %v664 = vrsqrt.pop %v663
    %v665 = vmul.f32 %v645, %v664
    %v666 = vmul.f32 %v646, %v664
    %v667 = vmul.f32 %v647, %v664
    %v668 = vmul.f32 %v648, %v664
    %669 = vset.pattern.permute.xlu0 7
    %670 = vperm.xlu0 %669, %v36
    %v671 = vpop.permute.xlu0 %670
    %673 = vset.pattern.permute.xlu0 7
    %674 = vperm.xlu0 %673, %v37
    %v675 = vpop.permute.xlu0 %674
    %677 = vset.pattern.permute.xlu0 7
    %678 = vperm.xlu0 %677, %v38
    %v679 = vpop.permute.xlu0 %678
    %681 = vset.pattern.permute.xlu0 7
    %682 = vperm.xlu0 %681, %v39
    %v683 = vpop.permute.xlu0 %682
    %v685 = vmul.f32 %v665, %v671
    %v686 = vmul.f32 %v666, %v675
    %v687 = vmul.f32 %v667, %v679
    %v688 = vmul.f32 %v668, %v683
    %689 = vset.pattern.permute.xlu0 8
    %690 = vperm.xlu0 %689, %v36
    %v691 = vpop.permute.xlu0 %690
    %693 = vset.pattern.permute.xlu0 8
    %694 = vperm.xlu0 %693, %v37
    %v695 = vpop.permute.xlu0 %694
    %697 = vset.pattern.permute.xlu0 8
    %698 = vperm.xlu0 %697, %v38
    %v699 = vpop.permute.xlu0 %698
    %701 = vset.pattern.permute.xlu0 8
    %702 = vperm.xlu0 %701, %v39
    %v703 = vpop.permute.xlu0 %702
    %v705 = vadd.f32 %v685, %v691
    %v706 = vadd.f32 %v686, %v695
    %v707 = vadd.f32 %v687, %v699
    %v708 = vadd.f32 %v688, %v703
    %709 = vset.pattern.permute.xlu0 9
    %710 = vperm.xlu0 %709, %v36
    %v711 = vpop.permute.xlu0 %710
    %713 = vset.pattern.permute.xlu0 9
    %714 = vperm.xlu0 %713, %v37
    %v715 = vpop.permute.xlu0 %714
    %717 = vset.pattern.permute.xlu0 9
    %718 = vperm.xlu0 %717, %v38
    %v719 = vpop.permute.xlu0 %718
    %721 = vset.pattern.permute.xlu0 9
    %722 = vperm.xlu0 %721, %v39
    %v723 = vpop.permute.xlu0 %722
    %v726 = vsel %vm299, %v32, 0
    %v729 = vsel %vm299, %v33, 0
    %v732 = vsel %vm299, %v34, 0
    %v735 = vsel %vm299, %v35, 0
    %737 = vmatprep.subr.mxu0 0.0
    %738 = vmatpush1.msra.mxu0 0.0
    %739 = vmatprep.subr.mxu0 0.0
    %740 = vmatpush1.msra.mxu0 0.0
    %741 = vmatprep.subr.mxu0 0.0
    %742 = vmatpush1.msra.mxu0 0.0
    %743 = vmatprep.subr.mxu0 0.0
    %744 = vmatpush1.msra.mxu0 0.0
    %745 = vmatprep.subr.mxu0 0.0
    %746 = vmatpush1.msra.mxu0 0.0
    %747 = vmatprep.subr.mxu0 0.0
    %748 = vmatpush1.msra.mxu0 0.0
    %749 = vmatprep.subr.mxu0 0.0
    %750 = vmatpush1.msra.mxu0 0.0
    %751 = vmatprep.subr.mxu0 0.0
    %752 = vmatpush1.msra.mxu0 0.0
    %753 = vmatprep.subr.mxu0 0.0
    %754 = vmatpush1.msra.mxu0 0.0
    %755 = vmatprep.subr.mxu0 0.0
    %756 = vmatpush1.msra.mxu0 0.0
    %757 = vmatprep.subr.mxu0 0.0
    %758 = vmatpush1.msra.mxu0 0.0
    %759 = vmatprep.subr.mxu0 0.0
    %760 = vmatpush1.msra.mxu0 0.0
    %761 = vmatprep.subr.mxu0 0.0
    %762 = vmatpush1.msra.mxu0 %v708
    %763 = vmatprep.subr.mxu0 0.0
    %764 = vmatpush1.msra.mxu0 %v707
    %765 = vmatprep.subr.mxu0 0.0
    %766 = vmatpush1.msra.mxu0 %v706
    %767 = vmatprep.subr.mxu0 0.0
    %768 = vmatpush1.msra.mxu0 %v705
    %769 = vmatprep.subr.mxu0 0.0
    %770 = vmatpush2.msra.mxu0 0.0
    %771 = vmatprep.subr.mxu0 0.0
    %772 = vmatpush2.msra.mxu0 0.0
    %773 = vmatprep.subr.mxu0 0.0
    %774 = vmatpush2.msra.mxu0 0.0
    %775 = vmatprep.subr.mxu0 0.0
    %776 = vmatpush2.msra.mxu0 0.0
    %777 = vmatprep.subr.mxu0 0.0
    %778 = vmatpush2.msra.mxu0 0.0
    %779 = vmatprep.subr.mxu0 0.0
    %780 = vmatpush2.msra.mxu0 0.0
    %781 = vmatprep.subr.mxu0 0.0
    %782 = vmatpush2.msra.mxu0 0.0
    %783 = vmatprep.subr.mxu0 0.0
    %784 = vmatpush2.msra.mxu0 0.0
    %785 = vmatprep.subr.mxu0 0.0
    %786 = vmatpush2.msra.mxu0 0.0
    %787 = vmatprep.subr.mxu0 0.0
    %788 = vmatpush2.msra.mxu0 0.0
    %789 = vmatprep.subr.mxu0 0.0
    %790 = vmatpush2.msra.mxu0 0.0
    %791 = vmatprep.subr.mxu0 0.0
    %792 = vmatpush2.msra.mxu0 0.0
    %793 = vmatprep.subr.mxu0 0.0
    %794 = vmatpush2.msra.mxu0 0.0
    %795 = vmatprep.subr.mxu0 0.0
    %796 = vmatpush2.msra.mxu0 0.0
    %797 = vmatprep.subr.mxu0 0.0
    %798 = vmatpush2.msra.mxu0 0.0
    %799 = vmatprep.subr.mxu0 0.0
    %800 = vmatpush2.msra.mxu0 0.0
    %801 = vmatprep.mubr.f32.mxu0 0.0
    %802 = vmatmul.mubr.f32.gmra.mxu0 %v726
    %v803 = vpop.f32.mrf.mxu0
    %v804 = vadd.f32 %v711, %v803
    %v805 = vpop.f32.mrf.mxu0
    %806 = vmatprep.mubr.f32.mxu0 0.0
    %807 = vmatmul.mubr.f32.gmra.mxu0 %v729
    %v808 = vpop.f32.mrf.mxu0
    %v809 = vadd.f32 %v715, %v808
    %v810 = vpop.f32.mrf.mxu0
    %811 = vmatprep.mubr.f32.mxu0 0.0
    %812 = vmatmul.mubr.f32.gmra.mxu0 %v732
    %v813 = vpop.f32.mrf.mxu0
    %v814 = vadd.f32 %v719, %v813
    %v815 = vpop.f32.mrf.mxu0
    %816 = vmatprep.mubr.f32.mxu0 0.0
    %817 = vmatmul.mubr.f32.gmra.mxu0 %v735
    %v818 = vpop.f32.mrf.mxu0
    %v819 = vadd.f32 %v723, %v818
    %v820 = vpop.f32.mrf.mxu0
    %821 = vdwg.mxu0
    %v822 = vmax.f32 %v804, 0.0
    %v823 = vmax.f32 %v809, 0.0
    %v824 = vmax.f32 %v814, 0.0
    %v825 = vmax.f32 %v819, 0.0
    %v826 = vadd.f32 %v822, %v823
    %v827 = vadd.f32 %v826, %v824
    %v828 = vadd.f32 %v827, %v825
    %v829 = vrot.slane %v828, 4
    %v830 = vadd.f32 %v828, %v829
    %v831 = vrot.slane %v830, 2
    %v832 = vadd.f32 %v830, %v831
    %v833 = vrot.slane %v832, 1
    %v834 = vadd.f32 %v832, %v833
    %v835 = vmul.f32 %v834, %v643
    %v836 = vsub.f32 %v822, %v835
    %v837 = vsub.f32 %v823, %v835
    %v838 = vsub.f32 %v824, %v835
    %v839 = vsub.f32 %v825, %v835
    %v840 = vmul.f32 %v836, %v836
    %v841 = vmul.f32 %v837, %v837
    %v842 = vmul.f32 %v838, %v838
    %v843 = vmul.f32 %v839, %v839
    %v844 = vadd.f32 %v840, %v841
    %v845 = vadd.f32 %v844, %v842
    %v846 = vadd.f32 %v845, %v843
    %v847 = vrot.slane %v846, 4
    %v848 = vadd.f32 %v846, %v847
    %v849 = vrot.slane %v848, 2
    %v850 = vadd.f32 %v848, %v849
    %v851 = vrot.slane %v850, 1
    %v852 = vadd.f32 %v850, %v851
    %v853 = vmul.f32 %v852, %v643
    %v854 = vadd.f32 %v853, 1e-05
    %v855 = vrsqrt.pop %v854
    %v856 = vmul.f32 %v836, %v855
    %v857 = vmul.f32 %v837, %v855
    %v858 = vmul.f32 %v838, %v855
    %v859 = vmul.f32 %v839, %v855
    %860 = vset.pattern.permute.xlu0 10
    %861 = vperm.xlu0 %860, %v36
    %v862 = vpop.permute.xlu0 %861
    %864 = vset.pattern.permute.xlu0 10
    %865 = vperm.xlu0 %864, %v37
    %v866 = vpop.permute.xlu0 %865
    %868 = vset.pattern.permute.xlu0 10
    %869 = vperm.xlu0 %868, %v38
    %v870 = vpop.permute.xlu0 %869
    %872 = vset.pattern.permute.xlu0 10
    %873 = vperm.xlu0 %872, %v39
    %v874 = vpop.permute.xlu0 %873
    %v876 = vmul.f32 %v856, %v862
    %v877 = vmul.f32 %v857, %v866
    %v878 = vmul.f32 %v858, %v870
    %v879 = vmul.f32 %v859, %v874
    %880 = vset.pattern.permute.xlu0 11
    %881 = vperm.xlu0 %880, %v36
    %v882 = vpop.permute.xlu0 %881
    %884 = vset.pattern.permute.xlu0 11
    %885 = vperm.xlu0 %884, %v37
    %v886 = vpop.permute.xlu0 %885
    %888 = vset.pattern.permute.xlu0 11
    %889 = vperm.xlu0 %888, %v38
    %v890 = vpop.permute.xlu0 %889
    %892 = vset.pattern.permute.xlu0 11
    %893 = vperm.xlu0 %892, %v39
    %v894 = vpop.permute.xlu0 %893
    %v896 = vadd.f32 %v876, %v882
    %v897 = vadd.f32 %v877, %v886
    %v898 = vadd.f32 %v878, %v890
    %v899 = vadd.f32 %v879, %v894
    %900 = vst [vmem:[#allocation2] sm:$0xff] %v896
    %901 = vst [vmem:[#allocation2 + $0x8] sm:$0xff] %v897
    %902 = vst [vmem:[#allocation2 + $0x10] sm:$0xff] %v898
    %903 = vst [vmem:[#allocation2 + $0x18] sm:$0xff] %v899
    // Predicated region
    $region18: #{tpu_custom_call.1} parent=1 // pred_check
      _
    $region19: #{tpu_custom_call.1} parent=1 // pred_check_branch
      %905 = sbr.rel (0) target = $region21
    $region20: #{tpu_custom_call.1} parent=1 // pred_region
      %s907 = ssub.s32 512, 512
      %908 = vsyncadd [#allocation3], %s907
      %s909 = sshll.u32 [#allocation2], 4
      %s910 = int_to_ptr.vmem [resolvable:$true] %s909
      %915 = dma.vmem_to_hbm [thread:$0]  %s910, 512, %s4, [#allocation3], 128, 128, 8
    $region21: #{tpu_custom_call.1} parent=1 // pred_fallthru
      _
    // Predicated region
    $region22: #{tpu_custom_call.1} parent=1 // pred_check
      _
    $region23: #{tpu_custom_call.1} parent=1 // pred_check_branch
      %917 = sbr.rel (0) target = $region25
    $region24: #{tpu_custom_call.1} parent=1 // pred_region
      %918 = dma.done [#allocation3], 512
    $region25: #{tpu_custom_call.1} parent=1 // pred_fallthru
      _
    %919 = vsyncpa [#allocation3], 1

</llo_original>
